<compile_context>
chip_gen: v7x
topology: tpu7x:2x2x1
jax: 0.10.0
libtpu: 0.0.40
codegen_flags: <defaults>
</compile_context>

<pallas_src>
import functools

import jax
import jax.numpy as jnp
from jax.experimental import pallas as pl
from jax.experimental.pallas import tpu as pltpu


# ---------------------------------------------------------------------------
# Pass 1: GTConv channel mix (1x1 conv over edge-type channels).
# ---------------------------------------------------------------------------
def _mix2_kernel(w1_ref, w2_ref, a_ref, o1_ref, o2_ref, *, c_in):
    """o1[o] = sum_c w1[o,c]*A[c]  and  o2[o] = sum_c w2[o,c]*A[c]  (A read once)."""
    o = pl.program_id(2)
    ac = a_ref[0].astype(jnp.float32)
    acc1 = w1_ref[o, 0] * ac
    acc2 = w2_ref[o, 0] * ac
    for c in range(1, c_in):                       # unrolled, c_in is static
        ac = a_ref[c].astype(jnp.float32)
        acc1 = acc1 + w1_ref[o, c] * ac
        acc2 = acc2 + w2_ref[o, c] * ac
    o1_ref[0] = acc1.astype(o1_ref.dtype)
    o2_ref[0] = acc2.astype(o2_ref.dtype)


def _mix1_kernel(w1_ref, a_ref, o1_ref, *, c_in):
    o = pl.program_id(2)
    acc = w1_ref[o, 0] * a_ref[0].astype(jnp.float32)
    for c in range(1, c_in):
        acc = acc + w1_ref[o, c] * a_ref[c].astype(jnp.float32)
    o1_ref[0] = acc.astype(o1_ref.dtype)


# ---------------------------------------------------------------------------
# Pass 2: batched matmul  H[o] = lhs[o] @ rhs[o]  with in-place f32 accumulation.
# ---------------------------------------------------------------------------
def _bmm_kernel(lhs_ref, rhs_ref, h_ref):
    k = pl.program_id(3)

    @pl.when(k == 0)
    def _init():
        h_ref[...] = jnp.zeros_like(h_ref)

    # bf16 (or f32) operands, f32 accumulation directly into the resident
    # output block (out index_map ignores k).
    h_ref[0] += jnp.dot(lhs_ref[0], rhs_ref[0],
                        preferred_element_type=jnp.float32)


# ---------------------------------------------------------------------------
# Tiling helpers.
# ---------------------------------------------------------------------------
def _padded_dim(n):
    """Round N up to a multiple of 128 (lane-aligned, MXU-friendly)."""
    return ((n + 127) // 128) * 128


def _pick(n_pad, candidates):
    for t in candidates:
        if n_pad % t == 0:
            return t
    return n_pad  # unreachable for n_pad multiple of 128, kept for safety


# ---------------------------------------------------------------------------
# Wrapper: Pallas TPU equivalent of GTLayer.forward.
# ---------------------------------------------------------------------------
def gt_layer(A, weight1, weight2=None, H_prev=None, first=True,
             compute_dtype=jnp.bfloat16):
    """Args:
      A:       (C_in, N, N)        stacked adjacency matrices (one per edge type)
      weight1: (C_out, C_in, 1, 1) raw GTConv weights (softmax applied here)
      weight2: (C_out, C_in, 1, 1) second GTConv weights   (first=True only)
      H_prev:  (C_out, N, N)       previous layer output    (first=False only)
      compute_dtype: dtype the matmul operands are streamed in (bf16 default;
        f32 accumulation is used regardless).
    Returns:
      (H, W): H is (C_out, N, N) float32; W is the list of softmaxed conv
      weights, matching the PyTorch module's return.
    """
    c_in, n, n2 = A.shape
    assert n == n2, "adjacency matrices must be square"
    c_out = weight1.shape[0]

    w1 = jax.nn.softmax(weight1.astype(jnp.float32).reshape(c_out, c_in), axis=1)
    if first:
        assert weight2 is not None, "first=True needs two GTConv weights"
        w2 = jax.nn.softmax(weight2.astype(jnp.float32).reshape(c_out, c_in), axis=1)

    n_pad = _padded_dim(n)
    A_p = A if n_pad == n else jnp.pad(
        A, ((0, 0), (0, n_pad - n), (0, n_pad - n)))

    smem_spec = pl.BlockSpec(memory_space=pltpu.MemorySpace.SMEM)
    vmem_limit = 32 * 1024 * 1024   # above v5e's 16 MiB default, safe everywhere

    # ---- pass 1: channel mix (memory-bound pre-pass) -----------------------
    tr = _pick(n_pad, (256, 128))
    # (i, j, o) with o innermost: the A block index does not change with o, so
    # the pipeline skips re-DMA of A across out-channels.
    mix_grid = (n_pad // tr, n_pad // tr, c_out)
    a_mix_spec = pl.BlockSpec((c_in, tr, tr), lambda i, j, o: (0, i, j))
    mix_out_spec = pl.BlockSpec((1, tr, tr), lambda i, j, o: (o, i, j))
    mix_out_shape = jax.ShapeDtypeStruct((c_out, n_pad, n_pad), compute_dtype)
    mix_params = pltpu.CompilerParams(
        dimension_semantics=("parallel", "parallel", "parallel"),
        vmem_limit_bytes=vmem_limit)

    if first:
        a, b = pl.pallas_call(
            functools.partial(_mix2_kernel, c_in=c_in),
            out_shape=(mix_out_shape, mix_out_shape),
            grid=mix_grid,
            in_specs=[smem_spec, smem_spec, a_mix_spec],
            out_specs=[mix_out_spec, mix_out_spec],
            compiler_params=mix_params,
        )(w1, w2, A_p)
        lhs, rhs = a, b
    else:
        assert H_prev is not None, "first=False needs H_prev"
        a = pl.pallas_call(
            functools.partial(_mix1_kernel, c_in=c_in),
            out_shape=mix_out_shape,
            grid=mix_grid,
            in_specs=[smem_spec, a_mix_spec],
            out_specs=mix_out_spec,
            compiler_params=mix_params,
        )(w1, A_p)
        hp = H_prev.astype(compute_dtype)
        if n_pad != n:
            hp = jnp.pad(hp, ((0, 0), (0, n_pad - n), (0, n_pad - n)))
        lhs, rhs = hp, a

    # ---- pass 2: batched matmul (MXU) --------------------------------------
    tm = _pick(n_pad, (512, 256, 128))
    tn = _pick(n_pad, (512, 256, 128))
    tk = _pick(n_pad, (256, 128))
    grid = (c_out, n_pad // tm, n_pad // tn, n_pad // tk)

    item = jnp.dtype(compute_dtype).itemsize
    cost = pl.CostEstimate(
        flops=2 * c_out * n_pad * n_pad * n_pad,
        transcendentals=0,
        bytes_accessed=(c_out * n_pad * n_pad * (n_pad // tn) * item   # lhs streams
                        + c_out * n_pad * n_pad * (n_pad // tm) * item  # rhs streams
                        + c_out * n_pad * n_pad * 4))                   # out write

    H_pad = pl.pallas_call(
        _bmm_kernel,
        out_shape=jax.ShapeDtypeStruct((c_out, n_pad, n_pad), jnp.float32),
        grid=grid,
        in_specs=[pl.BlockSpec((1, tm, tk), lambda o, i, j, k: (o, i, k)),
                  pl.BlockSpec((1, tk, tn), lambda o, i, j, k: (o, k, j))],
        out_specs=pl.BlockSpec((1, tm, tn), lambda o, i, j, k: (o, i, j)),
        compiler_params=pltpu.CompilerParams(
            dimension_semantics=("parallel", "parallel", "parallel", "arbitrary"),
            vmem_limit_bytes=vmem_limit),
        cost_estimate=cost,
    )(lhs, rhs)

    H = H_pad if n_pad == n else H_pad[:, :n, :n]

    if first:
        W = [w1.reshape(c_out, c_in, 1, 1), w2.reshape(c_out, c_in, 1, 1)]
    else:
        W = [w1.reshape(c_out, c_in, 1, 1)]
    return H, W


# ---------------------------------------------------------------------------
# Pure-JAX reference mirroring the PyTorch forward exactly (f32, HIGHEST prec).
# ---------------------------------------------------------------------------
def _gt_layer_ref(A, weight1, weight2=None, H_prev=None, first=True):
    A = A.astype(jnp.float32)
    c_out, c_in = weight1.shape[:2]
    hp = jax.lax.Precision.HIGHEST
    w1 = jax.nn.softmax(weight1.astype(jnp.float32).reshape(c_out, c_in), axis=1)
    a = jnp.einsum("oc,cij->oij", w1, A, precision=hp)
    if first:
        w2 = jax.nn.softmax(weight2.astype(jnp.float32).reshape(c_out, c_in), axis=1)
        b = jnp.einsum("oc,cij->oij", w2, A, precision=hp)
        H = jnp.einsum("oik,okj->oij", a, b, precision=hp)
        W = [w1.reshape(c_out, c_in, 1, 1), w2.reshape(c_out, c_in, 1, 1)]
    else:
        H = jnp.einsum("oik,okj->oij", H_prev.astype(jnp.float32), a, precision=hp)
        W = [w1.reshape(c_out, c_in, 1, 1)]
    return H, W


if __name__ == "__main__":
    key = jax.random.PRNGKey(0)
    k_a, k_w1, k_w2, k_a2, k_w3, k_w4 = jax.random.split(key, 6)

    # Shapes implied by the module: C_in edge types, C_out heads, N nodes.
    c_in, c_out, n = 4, 2, 16
    A = jax.random.uniform(k_a, (c_in, n, n), dtype=jnp.float32)
    # The PyTorch module initialises the 1x1-conv weights to a constant 0.1;
    # random weights exercise the softmax path more thoroughly.
    weight1 = 0.1 * jax.random.normal(k_w1, (c_out, c_in, 1, 1), dtype=jnp.float32)
    weight2 = 0.1 * jax.random.normal(k_w2, (c_out, c_in, 1, 1), dtype=jnp.float32)

    # --- first layer: H = conv1(A) @ conv2(A) --------------------------------
    H1_ref, W1_ref = _gt_layer_ref(A, weight1, weight2, first=True)

    # exact-parity f32 path
    H1, W1 = gt_layer(A, weight1, weight2, first=True, compute_dtype=jnp.float32)
    H1 = jax.block_until_ready(H1)
    assert jnp.allclose(H1, H1_ref, rtol=1e-4, atol=1e-4)
    assert all(jnp.allclose(w, wr, rtol=1e-6, atol=1e-6)
               for w, wr in zip(W1, W1_ref))

    # fast default path: bf16 operand streaming, f32 MXU accumulation
    H1b, _ = gt_layer(A, weight1, weight2, first=True)
    H1b = jax.block_until_ready(H1b)
    assert jnp.allclose(H1b, H1_ref, rtol=2e-2, atol=2e-2)

    # --- subsequent layer: H = H_prev @ conv1(A) ------------------------------
    H2_ref, _ = _gt_layer_ref(A, weight1, H_prev=H1_ref, first=False)
    H2, W2 = gt_layer(A, weight1, H_prev=H1_ref, first=False,
                      compute_dtype=jnp.float32)
    H2 = jax.block_until_ready(H2)
    assert jnp.allclose(H2, H2_ref, rtol=1e-4, atol=1e-4)
    assert len(W2) == 1

    H2b, _ = gt_layer(A, weight1, H_prev=H1_ref, first=False)
    H2b = jax.block_until_ready(H2b)
    assert jnp.allclose(H2b, H2_ref, rtol=2e-2, atol=2e-2)

    # --- ragged N (not a multiple of 128) exercises the zero-pad path ---------
    c_in2, c_out2, n2 = 3, 2, 200
    A2 = jax.random.uniform(k_a2, (c_in2, n2, n2), dtype=jnp.float32)
    w1b = 0.1 * jax.random.normal(k_w3, (c_out2, c_in2, 1, 1), dtype=jnp.float32)
    w2b = 0.1 * jax.random.normal(k_w4, (c_out2, c_in2, 1, 1), dtype=jnp.float32)
    H3_ref, _ = _gt_layer_ref(A2, w1b, w2b, first=True)

    H3, _ = gt_layer(A2, w1b, w2b, first=True, compute_dtype=jnp.float32)
    H3 = jax.block_until_ready(H3)
    assert jnp.allclose(H3, H3_ref, rtol=1e-4, atol=1e-3)

    H3b, _ = gt_layer(A2, w1b, w2b, first=True)
    H3b = jax.block_until_ready(H3b)
    assert jnp.allclose(H3b, H3_ref, rtol=2e-2, atol=1e-1)

    print("KERNEL_OK")
</pallas_src>

<mosaic_0001>
module attributes {stable_mosaic.version = 11 : i64} {
  func.func @_mix2_kernel(%arg0: i32, %arg1: i32, %arg2: i32, %arg3: memref<2x4xf32, #tpu.memory_space<smem>>, %arg4: memref<2x4xf32, #tpu.memory_space<smem>>, %arg5: memref<4x128x128xf32, #tpu.memory_space<vmem>>, %arg6: memref<1x128x128xf32, #tpu.memory_space<vmem>>, %arg7: memref<1x128x128xf32, #tpu.memory_space<vmem>>) attributes {dimension_semantics = [#tpu.dimension_semantics<parallel>, #tpu.dimension_semantics<parallel>, #tpu.dimension_semantics<parallel>], iteration_bounds = array<i64: 1, 1, 2>, scalar_prefetch = 0 : i64, scratch_operands = 0 : i64, tpu.core_type = #tpu.core_type<tc>, window_params = [{transform_indices = @transform_0, window_bounds = array<i64: 2, 4>}, {transform_indices = @transform_1, window_bounds = array<i64: 2, 4>}, {transform_indices = @transform_2, window_bounds = array<i64: 4, 128, 128>}, {transform_indices = @transform_3, window_bounds = array<i64: 1, 128, 128>}, {transform_indices = @transform_4, window_bounds = array<i64: 1, 128, 128>}]} {
    %c0 = arith.constant 0 : index
    %c0_0 = arith.constant 0 : index
    %c0_1 = arith.constant 0 : index
    %0 = vector.load %arg5[%c0, %c0_0, %c0_1] : memref<4x128x128xf32, #tpu.memory_space<vmem>>, vector<1x128x128xf32>
    %1 = vector.shape_cast %0 : vector<1x128x128xf32> to vector<128x128xf32>
    %2 = arith.index_cast %arg2 : i32 to index
    %c0_2 = arith.constant 0 : index
    %3 = memref.load %arg3[%2, %c0_2] : memref<2x4xf32, #tpu.memory_space<smem>>
    %4 = vector.broadcast %3 : f32 to vector<128x128xf32>
    %5 = arith.mulf %4, %1 : vector<128x128xf32>
    %6 = arith.index_cast %arg2 : i32 to index
    %c0_3 = arith.constant 0 : index
    %7 = memref.load %arg4[%6, %c0_3] : memref<2x4xf32, #tpu.memory_space<smem>>
    %8 = vector.broadcast %7 : f32 to vector<128x128xf32>
    %9 = arith.mulf %8, %1 : vector<128x128xf32>
    %c1 = arith.constant 1 : index
    %c0_4 = arith.constant 0 : index
    %c0_5 = arith.constant 0 : index
    %10 = vector.load %arg5[%c1, %c0_4, %c0_5] : memref<4x128x128xf32, #tpu.memory_space<vmem>>, vector<1x128x128xf32>
    %11 = vector.shape_cast %10 : vector<1x128x128xf32> to vector<128x128xf32>
    %12 = arith.index_cast %arg2 : i32 to index
    %c1_6 = arith.constant 1 : index
    %13 = memref.load %arg3[%12, %c1_6] : memref<2x4xf32, #tpu.memory_space<smem>>
    %14 = vector.broadcast %13 : f32 to vector<128x128xf32>
    %15 = arith.mulf %14, %11 : vector<128x128xf32>
    %16 = arith.addf %5, %15 : vector<128x128xf32>
    %17 = arith.index_cast %arg2 : i32 to index
    %c1_7 = arith.constant 1 : index
    %18 = memref.load %arg4[%17, %c1_7] : memref<2x4xf32, #tpu.memory_space<smem>>
    %19 = vector.broadcast %18 : f32 to vector<128x128xf32>
    %20 = arith.mulf %19, %11 : vector<128x128xf32>
    %21 = arith.addf %9, %20 : vector<128x128xf32>
    %c2 = arith.constant 2 : index
    %c0_8 = arith.constant 0 : index
    %c0_9 = arith.constant 0 : index
    %22 = vector.load %arg5[%c2, %c0_8, %c0_9] : memref<4x128x128xf32, #tpu.memory_space<vmem>>, vector<1x128x128xf32>
    %23 = vector.shape_cast %22 : vector<1x128x128xf32> to vector<128x128xf32>
    %24 = arith.index_cast %arg2 : i32 to index
    %c2_10 = arith.constant 2 : index
    %25 = memref.load %arg3[%24, %c2_10] : memref<2x4xf32, #tpu.memory_space<smem>>
    %26 = vector.broadcast %25 : f32 to vector<128x128xf32>
    %27 = arith.mulf %26, %23 : vector<128x128xf32>
    %28 = arith.addf %16, %27 : vector<128x128xf32>
    %29 = arith.index_cast %arg2 : i32 to index
    %c2_11 = arith.constant 2 : index
    %30 = memref.load %arg4[%29, %c2_11] : memref<2x4xf32, #tpu.memory_space<smem>>
    %31 = vector.broadcast %30 : f32 to vector<128x128xf32>
    %32 = arith.mulf %31, %23 : vector<128x128xf32>
    %33 = arith.addf %21, %32 : vector<128x128xf32>
    %c3 = arith.constant 3 : index
    %c0_12 = arith.constant 0 : index
    %c0_13 = arith.constant 0 : index
    %34 = vector.load %arg5[%c3, %c0_12, %c0_13] : memref<4x128x128xf32, #tpu.memory_space<vmem>>, vector<1x128x128xf32>
    %35 = vector.shape_cast %34 : vector<1x128x128xf32> to vector<128x128xf32>
    %36 = arith.index_cast %arg2 : i32 to index
    %c3_14 = arith.constant 3 : index
    %37 = memref.load %arg3[%36, %c3_14] : memref<2x4xf32, #tpu.memory_space<smem>>
    %38 = vector.broadcast %37 : f32 to vector<128x128xf32>
    %39 = arith.mulf %38, %35 : vector<128x128xf32>
    %40 = arith.addf %28, %39 : vector<128x128xf32>
    %41 = arith.index_cast %arg2 : i32 to index
    %c3_15 = arith.constant 3 : index
    %42 = memref.load %arg4[%41, %c3_15] : memref<2x4xf32, #tpu.memory_space<smem>>
    %43 = vector.broadcast %42 : f32 to vector<128x128xf32>
    %44 = arith.mulf %43, %35 : vector<128x128xf32>
    %45 = arith.addf %33, %44 : vector<128x128xf32>
    %c0_16 = arith.constant 0 : index
    %c0_17 = arith.constant 0 : index
    %c0_18 = arith.constant 0 : index
    %46 = vector.load %arg6[%c0_16, %c0_17, %c0_18] : memref<1x128x128xf32, #tpu.memory_space<vmem>>, vector<1x128x128xf32>
    %47 = vector.shape_cast %46 : vector<1x128x128xf32> to vector<128x128xf32>
    %48 = vector.shape_cast %40 : vector<128x128xf32> to vector<1x128x128xf32>
    tpu.vector_store %arg6[%c0_16, %c0_17, %c0_18], %48 {strides = array<i32>} : memref<1x128x128xf32, #tpu.memory_space<vmem>>, vector<1x128x128xf32>,
    %c0_19 = arith.constant 0 : index
    %c0_20 = arith.constant 0 : index
    %c0_21 = arith.constant 0 : index
    %49 = vector.load %arg7[%c0_19, %c0_20, %c0_21] : memref<1x128x128xf32, #tpu.memory_space<vmem>>, vector<1x128x128xf32>
    %50 = vector.shape_cast %49 : vector<1x128x128xf32> to vector<128x128xf32>
    %51 = vector.shape_cast %45 : vector<128x128xf32> to vector<1x128x128xf32>
    tpu.vector_store %arg7[%c0_19, %c0_20, %c0_21], %51 {strides = array<i32>} : memref<1x128x128xf32, #tpu.memory_space<vmem>>, vector<1x128x128xf32>,
    return
  }
  func.func @transform_0(%arg0: i32, %arg1: i32, %arg2: i32) -> (i32, i32) {
    %c0_i32 = arith.constant 0 : i32
    %c0_i32_0 = arith.constant 0 : i32
    %c0_i32_1 = arith.constant 0 : i32
    return %c0_i32, %c0_i32_0 : i32, i32
  }
  func.func @transform_1(%arg0: i32, %arg1: i32, %arg2: i32) -> (i32, i32) {
    %c0_i32 = arith.constant 0 : i32
    %c0_i32_0 = arith.constant 0 : i32
    %c0_i32_1 = arith.constant 0 : i32
    return %c0_i32, %c0_i32_0 : i32, i32
  }
  func.func @transform_2(%arg0: i32, %arg1: i32, %arg2: i32) -> (i32, i32, i32) {
    %c0_i32 = arith.constant 0 : i32
    %c0_i32_0 = arith.constant 0 : i32
    return %c0_i32, %arg0, %arg1 : i32, i32, i32
  }
  func.func @transform_3(%arg0: i32, %arg1: i32, %arg2: i32) -> (i32, i32, i32) {
    %c0_i32 = arith.constant 0 : i32
    return %arg2, %arg0, %arg1 : i32, i32, i32
  }
  func.func @transform_4(%arg0: i32, %arg1: i32, %arg2: i32) -> (i32, i32, i32) {
    %c0_i32 = arith.constant 0 : i32
    return %arg2, %arg0, %arg1 : i32, i32, i32
  }
}

</mosaic_0001>

<llo_original>
// kernel: tpu_custom_call.1
$region0: #{tpu_custom_call.1}
  #allocation0 [shape = 'u32[]', space=smem, size = 0x4, offset = 0x4, fixed_abs, tag = 'smem constant byte address 0x4 - core index']
  #allocation1 [shape = 'u32[144,128]{1,0:T(1,128)}', space=vmem, size = 0x12000, scoped, tag = 'internal scratch']
  %s0 = inlined_call_operand.hbm [shape: f32[2,4], index: 0, kind: input, shape index: {}]
  %s1 = inlined_call_operand.vmem [shape: f32[2,4], index: 1, kind: input, shape index: {}]
  %s2 = inlined_call_operand.hbm [shape: f32[4,128,128], index: 2, kind: input, shape index: {}]
  %s3 = inlined_call_operand.hbm [shape: f32[2,128,128], index: 3, kind: output, shape index: {0}]
  %s4 = inlined_call_operand.hbm [shape: f32[2,128,128], index: 4, kind: output, shape index: {1}]
  %5 = xla_tuple %s3, %s4
  %s6 = sld [smem:[#allocation0]]
  $region65: #{tpu_custom_call.1} parent=0
    _
  %s8 = ssub.s32 1, %s6
  %s9 = scalar_select 0, %s8, %s6
  $region1: #{tpu_custom_call.1} parent=0
    #allocation2 [shape = 'u8[1024]{0}', space=smem, size = 0x400, scoped, tag = 'input window, operand 0, single buffered']
    #allocation3 [shape = 's32[2]{0}', space=sflag, size = 0x8, scoped, tag = 'scoped memory for tpu_custom_call.1']
    #allocation4 [shape = 's32[2]{0}', space=sflag, size = 0x8, scoped, tag = 'scoped memory for tpu_custom_call.1']
    #allocation5 [shape = 's32[2]{0}', space=sflag, size = 0x8, scoped, tag = 'scoped memory for tpu_custom_call.1']
    #allocation6 [shape = 's32[2]{0}', space=sflag, size = 0x8, scoped, tag = 'scoped memory for tpu_custom_call.1']
    #allocation7 [shape = 'u8[1024]{0}', space=smem, size = 0x400, scoped, tag = 'input window, operand 1, single buffered']
    #allocation8 [shape = 'u8[262144]{0}', space=vmem, size = 0x40000, scoped, tag = 'input window, operand 2, single buffered']
    #allocation9 [shape = 'u8[131072]{0}', space=vmem, size = 0x20000, scoped, tag = 'output window, operand 0']
    #allocation10 [shape = 'u8[131072]{0}', space=vmem, size = 0x20000, scoped, tag = 'output window, operand 1']
    #allocation11 [shape = 's32[2]{0}', space=sflag, size = 0x8, scoped, tag = 'scoped memory for tpu_custom_call.1']
    %10 = vsyncpa [#allocation5], 0
    %11 = vsyncpa [#allocation6], 0
    %12 = vsyncpa [#allocation3], 0
    %13 = vsyncpa [#allocation4], 0
    %s14 = scalar_lea.sflag [#allocation4], 1
    %15 = vsyncpa %s14, 0
    %16 = vsyncpa [#allocation11], 0
    %s17 = scalar_lea.sflag [#allocation11], 1
    %18 = vsyncpa %s17, 0
    loop: start=0, step=1, limit=4
    $region2: #{tpu_custom_call.1} parent=1 // loop_pre_header
      _
    $region3: #{tpu_custom_call.1} parent=1 // loop_header
      %s20 = sphi 0, %s24
      %p21 = scmp.ge.s32.totalorder %s20, 4
      %s27 = sphi 0, %s46
      %s28 = sphi 0, %s42
      %s29 = sphi 0, %s38
      %s30 = sphi 0, %s27
      %s31 = sphi 0, %s28
      %s32 = sphi 0, %s29
      %s33 = sphi 0, %s30
      %s34 = sphi 0, %s31
      %s35 = sphi 0, %s32
      %s47 = sphi 0, %s47
      %s49 = sphi 0, %s47
      %s50 = sphi 0, %s49
      %s64 = sphi 0, %s50
      %s68 = sphi 0, %s68
      %s70 = sphi 0, %s68
      %s71 = sphi 0, %s70
      %s85 = sphi 0, %s71
      %s93 = sphi 0, %s95
      %s96 = sphi 0, %s93
      %s97 = sphi 0, %s96
      %s113 = sphi 0, %s97
      %s123 = sphi 0, %s125
      %s126 = sphi 0, %s123
      %s127 = sphi 0, %s126
      %s143 = sphi 0, %s127
      %s153 = sphi 0, %s155
      %s156 = sphi 0, %s153
      %s157 = sphi 0, %s156
      %s173 = sphi 0, %s157
    $region4: #{tpu_custom_call.1} parent=1 // loop_header_branch
      %23 = sbr.rel (%p21) target = $region8
    $region5: #{tpu_custom_call.1} parent=1 // loop_body
      %s25 = ssub.s32 %s20, 1
      %s26 = ssub.s32 %s20, 2
      %s36 = sadd.s32 1, %s29
      %p37 = scmp.ge.s32.totalorder %s36, 2
      %s38 = scalar_select %p37, 0, %s36
      %s39 = sadd.s32 1, %s28
      %s40 = scalar_select %p37, %s39, %s28
      %p41 = scmp.ge.s32.totalorder %s40, 1
      %s42 = scalar_select %p41, 0, %s40
      %s43 = sadd.s32 1, %s27
      %s44 = scalar_select %p41, %s43, %s27
      %p45 = scmp.ge.s32.totalorder %s44, 1
      %s46 = scalar_select %p45, 0, %s44
      %s48 = sadd.s32 %s47, 1
      %p51 = scmp.eq.s32.totalorder %s20, 1
      %p52 = scmp.ne.s32.totalorder %s47, %s49
      %p53 = scmp.eq.s32.totalorder %s20, 0
      %p54 = por %p52, %p53
      %p55 = scmp.ne.s32.totalorder %s47, %s49
      %p56 = scmp.eq.s32.totalorder %s25, 1
      %p57 = por %p55, %p56
      %p58 = scmp.ne.s32.totalorder %s49, %s50
      %p59 = scmp.eq.s32.totalorder %s25, 0
      %p60 = por %p58, %p59
      %p61 = scmp.ne.s32.totalorder %s49, %s50
      %p62 = scmp.eq.s32.totalorder %s26, 1
      %p63 = por %p61, %p62
      %p65 = scmp.ne.s32.totalorder %s50, %s64
      %p66 = scmp.eq.s32.totalorder %s26, 0
      %p67 = por %p65, %p66
      %s69 = sadd.s32 %s68, 1
      %p72 = scmp.eq.s32.totalorder %s20, 1
      %p73 = scmp.ne.s32.totalorder %s68, %s70
      %p74 = scmp.eq.s32.totalorder %s20, 0
      %p75 = por %p73, %p74
      %p76 = scmp.ne.s32.totalorder %s68, %s70
      %p77 = scmp.eq.s32.totalorder %s25, 1
      %p78 = por %p76, %p77
      %p79 = scmp.ne.s32.totalorder %s70, %s71
      %p80 = scmp.eq.s32.totalorder %s25, 0
      %p81 = por %p79, %p80
      %p82 = scmp.ne.s32.totalorder %s70, %s71
      %p83 = scmp.eq.s32.totalorder %s26, 1
      %p84 = por %p82, %p83
      %p86 = scmp.ne.s32.totalorder %s71, %s85
      %p87 = scmp.eq.s32.totalorder %s26, 0
      %p88 = por %p86, %p87
      %s89 = ssub.s32 %s27, %s46
      %s90 = ssub.s32 %s28, %s42
      %s91 = sor.u32 %s89, %s90
      %p92 = scmp.eq.s32.totalorder %s91, 0
      %s94 = sadd.s32 %s93, 1
      %s95 = scalar_select %p92, %s93, %s94
      %p98 = pneg %p92
      %p99 = scmp.eq.s32.totalorder %s20, 1
      %p100 = por %p98, %p99
      %p101 = scmp.ne.s32.totalorder %s93, %s96
      %p102 = scmp.eq.s32.totalorder %s20, 0
      %p103 = por %p101, %p102
      %p104 = scmp.ne.s32.totalorder %s93, %s96
      %p105 = scmp.eq.s32.totalorder %s25, 1
      %p106 = por %p104, %p105
      %p107 = scmp.ne.s32.totalorder %s96, %s97
      %p108 = scmp.eq.s32.totalorder %s25, 0
      %p109 = por %p107, %p108
      %p110 = scmp.ne.s32.totalorder %s96, %s97
      %p111 = scmp.eq.s32.totalorder %s26, 1
      %p112 = por %p110, %p111
      %p114 = scmp.ne.s32.totalorder %s97, %s113
      %p115 = scmp.eq.s32.totalorder %s26, 0
      %p116 = por %p114, %p115
      %s117 = ssub.s32 %s29, %s38
      %s118 = ssub.s32 %s27, %s46
      %s119 = sor.u32 %s117, %s118
      %s120 = ssub.s32 %s28, %s42
      %s121 = sor.u32 %s119, %s120
      %p122 = scmp.eq.s32.totalorder %s121, 0
      %s124 = sadd.s32 %s123, 1
      %s125 = scalar_select %p122, %s123, %s124
      %p128 = pneg %p122
      %p129 = scmp.eq.s32.totalorder %s20, 1
      %p130 = por %p128, %p129
      %p131 = scmp.ne.s32.totalorder %s123, %s126
      %p132 = scmp.eq.s32.totalorder %s20, 0
      %p133 = por %p131, %p132
      %p134 = scmp.ne.s32.totalorder %s123, %s126
      %p135 = scmp.eq.s32.totalorder %s25, 1
      %p136 = por %p134, %p135
      %p137 = scmp.ne.s32.totalorder %s126, %s127
      %p138 = scmp.eq.s32.totalorder %s25, 0
      %p139 = por %p137, %p138
      %p140 = scmp.ne.s32.totalorder %s126, %s127
      %p141 = scmp.eq.s32.totalorder %s26, 1
      %p142 = por %p140, %p141
      %p144 = scmp.ne.s32.totalorder %s127, %s143
      %p145 = scmp.eq.s32.totalorder %s26, 0
      %p146 = por %p144, %p145
      %s147 = ssub.s32 %s29, %s38
      %s148 = ssub.s32 %s27, %s46
      %s149 = sor.u32 %s147, %s148
      %s150 = ssub.s32 %s28, %s42
      %s151 = sor.u32 %s149, %s150
      %p152 = scmp.eq.s32.totalorder %s151, 0
      %s154 = sadd.s32 %s153, 1
      %s155 = scalar_select %p152, %s153, %s154
      %p158 = pneg %p152
      %p159 = scmp.eq.s32.totalorder %s20, 1
      %p160 = por %p158, %p159
      %p161 = scmp.ne.s32.totalorder %s153, %s156
      %p162 = scmp.eq.s32.totalorder %s20, 0
      %p163 = por %p161, %p162
      %p164 = scmp.ne.s32.totalorder %s153, %s156
      %p165 = scmp.eq.s32.totalorder %s25, 1
      %p166 = por %p164, %p165
      %p167 = scmp.ne.s32.totalorder %s156, %s157
      %p168 = scmp.eq.s32.totalorder %s25, 0
      %p169 = por %p167, %p168
      %p170 = scmp.ne.s32.totalorder %s156, %s157
      %p171 = scmp.eq.s32.totalorder %s26, 1
      %p172 = por %p170, %p171
      %p174 = scmp.ne.s32.totalorder %s157, %s173
      %p175 = scmp.eq.s32.totalorder %s26, 0
      %p176 = por %p174, %p175
      %p177 = scmp.le.s32.totalorder 1, %s20
      %p178 = scmp.lt.s32.totalorder %s20, 3
      %p179 = pnand %p177, %p178
      %p180 = pneg %p179
      // Predicated region
      $region9: #{tpu_custom_call.1} parent=5 // pred_check
        _
      $region10: #{tpu_custom_call.1} parent=5 // pred_check_branch
        %182 = sbr.rel (%p179) target = $region12
      $region11: #{tpu_custom_call.1} parent=5 // pred_region
        %s183 = ssub.s32 %s20, 1
        // Predicated region
        $region13: #{tpu_custom_call.1} parent=11 // pred_check
          %p184 = pneg %p60
        $region14: #{tpu_custom_call.1} parent=11 // pred_check_branch
          %186 = sbr.rel (%p184) target = $region16
        $region15: #{tpu_custom_call.1} parent=11 // pred_region
          %s188 = ssub.s32 32, 32
          %189 = vsyncadd [#allocation5], %s188
          %192 = dma.hbm_to_smem %s0, 32, [#allocation2], [#allocation5]
        $region16: #{tpu_custom_call.1} parent=11 // pred_fallthru
          _
        // Predicated region
        $region17: #{tpu_custom_call.1} parent=11 // pred_check
          %p193 = pneg %p81
        $region18: #{tpu_custom_call.1} parent=11 // pred_check_branch
          %195 = sbr.rel (%p193) target = $region20
        $region19: #{tpu_custom_call.1} parent=11 // pred_region
          %s197 = ssub.s32 32, 32
          %198 = vsyncadd [#allocation6], %s197
          %s200 = sshll.u32 %s1, 4
          %s201 = int_to_ptr.vmem [resolvable:$true] %s200
          %203 = dma.vmem_to_smem %s201, 32, [#allocation7], [#allocation6]
        $region20: #{tpu_custom_call.1} parent=11 // pred_fallthru
          _
        // Predicated region
        $region21: #{tpu_custom_call.1} parent=11 // pred_check
          %p204 = pneg %p109
        $region22: #{tpu_custom_call.1} parent=11 // pred_check_branch
          %206 = sbr.rel (%p204) target = $region24
        $region23: #{tpu_custom_call.1} parent=11 // pred_region
          %s207 = smul.u32 16, %s30
          %s209 = ssub.s32 8192, 8192
          %210 = vsyncadd [#allocation3], %s209
          %s211 = sadd.s32 %s31, %s207
          %s212 = smul.addr %s211, 128
          %s213 = scalar_lea.hbm %s2, %s212
          %s214 = sshll.u32 [#allocation8], 4
          %s215 = int_to_ptr.vmem [resolvable:$true] %s214
          %220 = dma.hbm_to_vmem [thread:$0]  %s213, 8192, %s215, [#allocation3], 128, 128, 8
        $region24: #{tpu_custom_call.1} parent=11 // pred_fallthru
          _
      $region12: #{tpu_custom_call.1} parent=5 // pred_fallthru
        _
      %p221 = scmp.lt.s32.totalorder %s20, 2
      // Predicated region
      $region25: #{tpu_custom_call.1} parent=5 // pred_check
        %p222 = pneg %p221
      $region26: #{tpu_custom_call.1} parent=5 // pred_check_branch
        %224 = sbr.rel (%p222) target = $region28
      $region27: #{tpu_custom_call.1} parent=5 // pred_region
        _
      $region28: #{tpu_custom_call.1} parent=5 // pred_fallthru
        _
      %p225 = scmp.le.s32.totalorder 1, %s20
      %p226 = scmp.lt.s32.totalorder %s20, 3
      %p227 = pnand %p225, %p226
      %p228 = pneg %p227
      // Predicated region
      $region29: #{tpu_custom_call.1} parent=5 // pred_check
        _
      $region30: #{tpu_custom_call.1} parent=5 // pred_check_branch
        %230 = sbr.rel (%p227) target = $region32
      $region31: #{tpu_custom_call.1} parent=5 // pred_region
        %s231 = ssub.s32 %s20, 1
        // Predicated region
        $region33: #{tpu_custom_call.1} parent=31 // pred_check
          %p232 = pneg %p60
        $region34: #{tpu_custom_call.1} parent=31 // pred_check_branch
          %234 = sbr.rel (%p232) target = $region36
        $region35: #{tpu_custom_call.1} parent=31 // pred_region
          %235 = dma.done [#allocation5], 32
        $region36: #{tpu_custom_call.1} parent=31 // pred_fallthru
          _
        // Predicated region
        $region37: #{tpu_custom_call.1} parent=31 // pred_check
          %p236 = pneg %p81
        $region38: #{tpu_custom_call.1} parent=31 // pred_check_branch
          %238 = sbr.rel (%p236) target = $region40
        $region39: #{tpu_custom_call.1} parent=31 // pred_region
          %239 = dma.done [#allocation6], 32
        $region40: #{tpu_custom_call.1} parent=31 // pred_fallthru
          _
        // Predicated region
        $region41: #{tpu_custom_call.1} parent=31 // pred_check
          %p240 = pneg %p109
        $region42: #{tpu_custom_call.1} parent=31 // pred_check_branch
          %242 = sbr.rel (%p240) target = $region44
        $region43: #{tpu_custom_call.1} parent=31 // pred_region
          %243 = dma.done [#allocation3], 8192
        $region44: #{tpu_custom_call.1} parent=31 // pred_fallthru
          _
        %244 = sfence
        %p245 = pneg %p60
        %p246 = pneg %p57
        %p247 = pneg %p81
        %p248 = pneg %p78
        %p249 = pneg %p109
        %p250 = pneg %p106
        %p251 = pneg %p139
        %p252 = pneg %p136
        %s253 = sand.u32 %s126, 1
        %s254 = scalar_lea.sflag [#allocation4], %s253
        %s255 = sand.u32 %s126, 1
        %s256 = smul.addr %s255, 128
        %s257 = scalar_lea.vmem [#allocation9], %s256
        %p258 = pneg %p169
        %p259 = pneg %p166
        %s260 = sand.u32 %s156, 1
        %s261 = scalar_lea.sflag [#allocation11], %s260
        %s262 = sand.u32 %s156, 1
        %s263 = smul.addr %s262, 128
        %s264 = scalar_lea.vmem [#allocation10], %s263
        %s265 = smul.u32 16, %s30
        %s266 = smul.u32 16, %s30
        %s267 = smul.u32 16, %s30
        %v268 = vld [vmem:[#allocation8] sm:$0xff]
        %v269 = vld [vmem:[#allocation8 + $0x8] sm:$0xff]
        %v270 = vld [vmem:[#allocation8 + $0x10] sm:$0xff]
        %v271 = vld [vmem:[#allocation8 + $0x18] sm:$0xff]
        %v272 = vld [vmem:[#allocation8 + $0x20] sm:$0xff]
        %v273 = vld [vmem:[#allocation8 + $0x28] sm:$0xff]
        %v274 = vld [vmem:[#allocation8 + $0x30] sm:$0xff]
        %v275 = vld [vmem:[#allocation8 + $0x38] sm:$0xff]
        %v276 = vld [vmem:[#allocation8 + $0x40] sm:$0xff]
        %v277 = vld [vmem:[#allocation8 + $0x48] sm:$0xff]
        %v278 = vld [vmem:[#allocation8 + $0x50] sm:$0xff]
        %v279 = vld [vmem:[#allocation8 + $0x58] sm:$0xff]
        %v280 = vld [vmem:[#allocation8 + $0x60] sm:$0xff]
        %v281 = vld [vmem:[#allocation8 + $0x68] sm:$0xff]
        %v282 = vld [vmem:[#allocation8 + $0x70] sm:$0xff]
        %v283 = vld [vmem:[#allocation8 + $0x78] sm:$0xff]
        %s284 = smul.u32 %s32, 128
        %s285 = sld [smem:[#allocation2 + %s284]]
        %v286 = vstv %s285
        %v287 = vmul.f32 %v286, %v268
        %v288 = vmul.f32 %v286, %v269
        %v289 = vmul.f32 %v286, %v270
        %v290 = vmul.f32 %v286, %v271
        %v291 = vmul.f32 %v286, %v272
        %v292 = vmul.f32 %v286, %v273
        %v293 = vmul.f32 %v286, %v274
        %v294 = vmul.f32 %v286, %v275
        %v295 = vmul.f32 %v286, %v276
        %v296 = vmul.f32 %v286, %v277
        %v297 = vmul.f32 %v286, %v278
        %v298 = vmul.f32 %v286, %v279
        %v299 = vmul.f32 %v286, %v280
        %v300 = vmul.f32 %v286, %v281
        %v301 = vmul.f32 %v286, %v282
        %v302 = vmul.f32 %v286, %v283
        %s303 = sld [smem:[#allocation7 + %s284]]
        %v304 = vstv %s303
        %v305 = vmul.f32 %v304, %v268
        %v306 = vmul.f32 %v304, %v269
        %v307 = vmul.f32 %v304, %v270
        %v308 = vmul.f32 %v304, %v271
        %v309 = vmul.f32 %v304, %v272
        %v310 = vmul.f32 %v304, %v273
        %v311 = vmul.f32 %v304, %v274
        %v312 = vmul.f32 %v304, %v275
        %v313 = vmul.f32 %v304, %v276
        %v314 = vmul.f32 %v304, %v277
        %v315 = vmul.f32 %v304, %v278
        %v316 = vmul.f32 %v304, %v279
        %v317 = vmul.f32 %v304, %v280
        %v318 = vmul.f32 %v304, %v281
        %v319 = vmul.f32 %v304, %v282
        %v320 = vmul.f32 %v304, %v283
        %s321 = scalar_lea.vmem [#allocation8], 128
        %v322 = vld [vmem:[%s321] sm:$0xff]
        %v323 = vld [vmem:[%s321 + $0x8] sm:$0xff]
        %v324 = vld [vmem:[%s321 + $0x10] sm:$0xff]
        %v325 = vld [vmem:[%s321 + $0x18] sm:$0xff]
        %v326 = vld [vmem:[%s321 + $0x20] sm:$0xff]
        %v327 = vld [vmem:[%s321 + $0x28] sm:$0xff]
        %v328 = vld [vmem:[%s321 + $0x30] sm:$0xff]
        %v329 = vld [vmem:[%s321 + $0x38] sm:$0xff]
        %v330 = vld [vmem:[%s321 + $0x40] sm:$0xff]
        %v331 = vld [vmem:[%s321 + $0x48] sm:$0xff]
        %v332 = vld [vmem:[%s321 + $0x50] sm:$0xff]
        %v333 = vld [vmem:[%s321 + $0x58] sm:$0xff]
        %v334 = vld [vmem:[%s321 + $0x60] sm:$0xff]
        %v335 = vld [vmem:[%s321 + $0x68] sm:$0xff]
        %v336 = vld [vmem:[%s321 + $0x70] sm:$0xff]
        %v337 = vld [vmem:[%s321 + $0x78] sm:$0xff]
        %s338 = sadd.s32 %s284, 1
        %s339 = sld [smem:[#allocation2 + %s338]]
        %v340 = vstv %s339
        %v341 = vmul.f32 %v340, %v322
        %v342 = vmul.f32 %v340, %v323
        %v343 = vmul.f32 %v340, %v324
        %v344 = vmul.f32 %v340, %v325
        %v345 = vmul.f32 %v340, %v326
        %v346 = vmul.f32 %v340, %v327
        %v347 = vmul.f32 %v340, %v328
        %v348 = vmul.f32 %v340, %v329
        %v349 = vmul.f32 %v340, %v330
        %v350 = vmul.f32 %v340, %v331
        %v351 = vmul.f32 %v340, %v332
        %v352 = vmul.f32 %v340, %v333
        %v353 = vmul.f32 %v340, %v334
        %v354 = vmul.f32 %v340, %v335
        %v355 = vmul.f32 %v340, %v336
        %v356 = vmul.f32 %v340, %v337
        %v357 = vadd.f32 %v287, %v341
        %v358 = vadd.f32 %v288, %v342
        %v359 = vadd.f32 %v289, %v343
        %v360 = vadd.f32 %v290, %v344
        %v361 = vadd.f32 %v291, %v345
        %v362 = vadd.f32 %v292, %v346
        %v363 = vadd.f32 %v293, %v347
        %v364 = vadd.f32 %v294, %v348
        %v365 = vadd.f32 %v295, %v349
        %v366 = vadd.f32 %v296, %v350
        %v367 = vadd.f32 %v297, %v351
        %v368 = vadd.f32 %v298, %v352
        %v369 = vadd.f32 %v299, %v353
        %v370 = vadd.f32 %v300, %v354
        %v371 = vadd.f32 %v301, %v355
        %v372 = vadd.f32 %v302, %v356
        %s373 = sld [smem:[#allocation7 + %s338]]
        %v374 = vstv %s373
        %v375 = vmul.f32 %v374, %v322
        %v376 = vmul.f32 %v374, %v323
        %v377 = vmul.f32 %v374, %v324
        %v378 = vmul.f32 %v374, %v325
        %v379 = vmul.f32 %v374, %v326
        %v380 = vmul.f32 %v374, %v327
        %v381 = vmul.f32 %v374, %v328
        %v382 = vmul.f32 %v374, %v329
        %v383 = vmul.f32 %v374, %v330
        %v384 = vmul.f32 %v374, %v331
        %v385 = vmul.f32 %v374, %v332
        %v386 = vmul.f32 %v374, %v333
        %v387 = vmul.f32 %v374, %v334
        %v388 = vmul.f32 %v374, %v335
        %v389 = vmul.f32 %v374, %v336
        %v390 = vmul.f32 %v374, %v337
        %v391 = vadd.f32 %v305, %v375
        %v392 = vadd.f32 %v306, %v376
        %v393 = vadd.f32 %v307, %v377
        %v394 = vadd.f32 %v308, %v378
        %v395 = vadd.f32 %v309, %v379
        %v396 = vadd.f32 %v310, %v380
        %v397 = vadd.f32 %v311, %v381
        %v398 = vadd.f32 %v312, %v382
        %v399 = vadd.f32 %v313, %v383
        %v400 = vadd.f32 %v314, %v384
        %v401 = vadd.f32 %v315, %v385
        %v402 = vadd.f32 %v316, %v386
        %v403 = vadd.f32 %v317, %v387
        %v404 = vadd.f32 %v318, %v388
        %v405 = vadd.f32 %v319, %v389
        %v406 = vadd.f32 %v320, %v390
        %s407 = scalar_lea.vmem [#allocation8], 256
        %v408 = vld [vmem:[%s407] sm:$0xff]
        %v409 = vld [vmem:[%s407 + $0x8] sm:$0xff]
        %v410 = vld [vmem:[%s407 + $0x10] sm:$0xff]
        %v411 = vld [vmem:[%s407 + $0x18] sm:$0xff]
        %v412 = vld [vmem:[%s407 + $0x20] sm:$0xff]
        %v413 = vld [vmem:[%s407 + $0x28] sm:$0xff]
        %v414 = vld [vmem:[%s407 + $0x30] sm:$0xff]
        %v415 = vld [vmem:[%s407 + $0x38] sm:$0xff]
        %v416 = vld [vmem:[%s407 + $0x40] sm:$0xff]
        %v417 = vld [vmem:[%s407 + $0x48] sm:$0xff]
        %v418 = vld [vmem:[%s407 + $0x50] sm:$0xff]
        %v419 = vld [vmem:[%s407 + $0x58] sm:$0xff]
        %v420 = vld [vmem:[%s407 + $0x60] sm:$0xff]
        %v421 = vld [vmem:[%s407 + $0x68] sm:$0xff]
        %v422 = vld [vmem:[%s407 + $0x70] sm:$0xff]
        %v423 = vld [vmem:[%s407 + $0x78] sm:$0xff]
        %s424 = sadd.s32 %s284, 2
        %s425 = sld [smem:[#allocation2 + %s424]]
        %v426 = vstv %s425
        %v427 = vmul.f32 %v426, %v408
        %v428 = vmul.f32 %v426, %v409
        %v429 = vmul.f32 %v426, %v410
        %v430 = vmul.f32 %v426, %v411
        %v431 = vmul.f32 %v426, %v412
        %v432 = vmul.f32 %v426, %v413
        %v433 = vmul.f32 %v426, %v414
        %v434 = vmul.f32 %v426, %v415
        %v435 = vmul.f32 %v426, %v416
        %v436 = vmul.f32 %v426, %v417
        %v437 = vmul.f32 %v426, %v418
        %v438 = vmul.f32 %v426, %v419
        %v439 = vmul.f32 %v426, %v420
        %v440 = vmul.f32 %v426, %v421
        %v441 = vmul.f32 %v426, %v422
        %v442 = vmul.f32 %v426, %v423
        %v443 = vadd.f32 %v357, %v427
        %v444 = vadd.f32 %v358, %v428
        %v445 = vadd.f32 %v359, %v429
        %v446 = vadd.f32 %v360, %v430
        %v447 = vadd.f32 %v361, %v431
        %v448 = vadd.f32 %v362, %v432
        %v449 = vadd.f32 %v363, %v433
        %v450 = vadd.f32 %v364, %v434
        %v451 = vadd.f32 %v365, %v435
        %v452 = vadd.f32 %v366, %v436
        %v453 = vadd.f32 %v367, %v437
        %v454 = vadd.f32 %v368, %v438
        %v455 = vadd.f32 %v369, %v439
        %v456 = vadd.f32 %v370, %v440
        %v457 = vadd.f32 %v371, %v441
        %v458 = vadd.f32 %v372, %v442
        %s459 = sld [smem:[#allocation7 + %s424]]
        %v460 = vstv %s459
        %v461 = vmul.f32 %v460, %v408
        %v462 = vmul.f32 %v460, %v409
        %v463 = vmul.f32 %v460, %v410
        %v464 = vmul.f32 %v460, %v411
        %v465 = vmul.f32 %v460, %v412
        %v466 = vmul.f32 %v460, %v413
        %v467 = vmul.f32 %v460, %v414
        %v468 = vmul.f32 %v460, %v415
        %v469 = vmul.f32 %v460, %v416
        %v470 = vmul.f32 %v460, %v417
        %v471 = vmul.f32 %v460, %v418
        %v472 = vmul.f32 %v460, %v419
        %v473 = vmul.f32 %v460, %v420
        %v474 = vmul.f32 %v460, %v421
        %v475 = vmul.f32 %v460, %v422
        %v476 = vmul.f32 %v460, %v423
        %v477 = vadd.f32 %v391, %v461
        %v478 = vadd.f32 %v392, %v462
        %v479 = vadd.f32 %v393, %v463
        %v480 = vadd.f32 %v394, %v464
        %v481 = vadd.f32 %v395, %v465
        %v482 = vadd.f32 %v396, %v466
        %v483 = vadd.f32 %v397, %v467
        %v484 = vadd.f32 %v398, %v468
        %v485 = vadd.f32 %v399, %v469
        %v486 = vadd.f32 %v400, %v470
        %v487 = vadd.f32 %v401, %v471
        %v488 = vadd.f32 %v402, %v472
        %v489 = vadd.f32 %v403, %v473
        %v490 = vadd.f32 %v404, %v474
        %v491 = vadd.f32 %v405, %v475
        %v492 = vadd.f32 %v406, %v476
        %s493 = scalar_lea.vmem [#allocation8], 384
        %v494 = vld [vmem:[%s493] sm:$0xff]
        %v495 = vld [vmem:[%s493 + $0x8] sm:$0xff]
        %v496 = vld [vmem:[%s493 + $0x10] sm:$0xff]
        %v497 = vld [vmem:[%s493 + $0x18] sm:$0xff]
        %v498 = vld [vmem:[%s493 + $0x20] sm:$0xff]
        %v499 = vld [vmem:[%s493 + $0x28] sm:$0xff]
        %v500 = vld [vmem:[%s493 + $0x30] sm:$0xff]
        %v501 = vld [vmem:[%s493 + $0x38] sm:$0xff]
        %v502 = vld [vmem:[%s493 + $0x40] sm:$0xff]
        %v503 = vld [vmem:[%s493 + $0x48] sm:$0xff]
        %v504 = vld [vmem:[%s493 + $0x50] sm:$0xff]
        %v505 = vld [vmem:[%s493 + $0x58] sm:$0xff]
        %v506 = vld [vmem:[%s493 + $0x60] sm:$0xff]
        %v507 = vld [vmem:[%s493 + $0x68] sm:$0xff]
        %v508 = vld [vmem:[%s493 + $0x70] sm:$0xff]
        %v509 = vld [vmem:[%s493 + $0x78] sm:$0xff]
        %s510 = sadd.s32 %s284, 3
        %s511 = sld [smem:[#allocation2 + %s510]]
        %v512 = vstv %s511
        %v513 = vmul.f32 %v512, %v494
        %v514 = vmul.f32 %v512, %v495
        %v515 = vmul.f32 %v512, %v496
        %v516 = vmul.f32 %v512, %v497
        %v517 = vmul.f32 %v512, %v498
        %v518 = vmul.f32 %v512, %v499
        %v519 = vmul.f32 %v512, %v500
        %v520 = vmul.f32 %v512, %v501
        %v521 = vmul.f32 %v512, %v502
        %v522 = vmul.f32 %v512, %v503
        %v523 = vmul.f32 %v512, %v504
        %v524 = vmul.f32 %v512, %v505
        %v525 = vmul.f32 %v512, %v506
        %v526 = vmul.f32 %v512, %v507
        %v527 = vmul.f32 %v512, %v508
        %v528 = vmul.f32 %v512, %v509
        %v529 = vadd.f32 %v443, %v513
        %v530 = vadd.f32 %v444, %v514
        %v531 = vadd.f32 %v445, %v515
        %v532 = vadd.f32 %v446, %v516
        %v533 = vadd.f32 %v447, %v517
        %v534 = vadd.f32 %v448, %v518
        %v535 = vadd.f32 %v449, %v519
        %v536 = vadd.f32 %v450, %v520
        %v537 = vadd.f32 %v451, %v521
        %v538 = vadd.f32 %v452, %v522
        %v539 = vadd.f32 %v453, %v523
        %v540 = vadd.f32 %v454, %v524
        %v541 = vadd.f32 %v455, %v525
        %v542 = vadd.f32 %v456, %v526
        %v543 = vadd.f32 %v457, %v527
        %v544 = vadd.f32 %v458, %v528
        %s545 = sld [smem:[#allocation7 + %s510]]
        %v546 = vstv %s545
        %v547 = vmul.f32 %v546, %v494
        %v548 = vmul.f32 %v546, %v495
        %v549 = vmul.f32 %v546, %v496
        %v550 = vmul.f32 %v546, %v497
        %v551 = vmul.f32 %v546, %v498
        %v552 = vmul.f32 %v546, %v499
        %v553 = vmul.f32 %v546, %v500
        %v554 = vmul.f32 %v546, %v501
        %v555 = vmul.f32 %v546, %v502
        %v556 = vmul.f32 %v546, %v503
        %v557 = vmul.f32 %v546, %v504
        %v558 = vmul.f32 %v546, %v505
        %v559 = vmul.f32 %v546, %v506
        %v560 = vmul.f32 %v546, %v507
        %v561 = vmul.f32 %v546, %v508
        %v562 = vmul.f32 %v546, %v509
        %v563 = vadd.f32 %v477, %v547
        %v564 = vadd.f32 %v478, %v548
        %v565 = vadd.f32 %v479, %v549
        %v566 = vadd.f32 %v480, %v550
        %v567 = vadd.f32 %v481, %v551
        %v568 = vadd.f32 %v482, %v552
        %v569 = vadd.f32 %v483, %v553
        %v570 = vadd.f32 %v484, %v554
        %v571 = vadd.f32 %v485, %v555
        %v572 = vadd.f32 %v486, %v556
        %v573 = vadd.f32 %v487, %v557
        %v574 = vadd.f32 %v488, %v558
        %v575 = vadd.f32 %v489, %v559
        %v576 = vadd.f32 %v490, %v560
        %v577 = vadd.f32 %v491, %v561
        %v578 = vadd.f32 %v492, %v562
        %579 = vst [vmem:[%s257] sm:$0xff] %v529
        %580 = vst [vmem:[%s257 + $0x8] sm:$0xff] %v530
        %581 = vst [vmem:[%s257 + $0x10] sm:$0xff] %v531
        %582 = vst [vmem:[%s257 + $0x18] sm:$0xff] %v532
        %583 = vst [vmem:[%s257 + $0x20] sm:$0xff] %v533
        %584 = vst [vmem:[%s257 + $0x28] sm:$0xff] %v534
        %585 = vst [vmem:[%s257 + $0x30] sm:$0xff] %v535
        %586 = vst [vmem:[%s257 + $0x38] sm:$0xff] %v536
        %587 = vst [vmem:[%s257 + $0x40] sm:$0xff] %v537
        %588 = vst [vmem:[%s257 + $0x48] sm:$0xff] %v538
        %589 = vst [vmem:[%s257 + $0x50] sm:$0xff] %v539
        %590 = vst [vmem:[%s257 + $0x58] sm:$0xff] %v540
        %591 = vst [vmem:[%s257 + $0x60] sm:$0xff] %v541
        %592 = vst [vmem:[%s257 + $0x68] sm:$0xff] %v542
        %593 = vst [vmem:[%s257 + $0x70] sm:$0xff] %v543
        %594 = vst [vmem:[%s257 + $0x78] sm:$0xff] %v544
        %595 = vst [vmem:[%s264] sm:$0xff] %v563
        %596 = vst [vmem:[%s264 + $0x8] sm:$0xff] %v564
        %597 = vst [vmem:[%s264 + $0x10] sm:$0xff] %v565
        %598 = vst [vmem:[%s264 + $0x18] sm:$0xff] %v566
        %599 = vst [vmem:[%s264 + $0x20] sm:$0xff] %v567
        %600 = vst [vmem:[%s264 + $0x28] sm:$0xff] %v568
        %601 = vst [vmem:[%s264 + $0x30] sm:$0xff] %v569
        %602 = vst [vmem:[%s264 + $0x38] sm:$0xff] %v570
        %603 = vst [vmem:[%s264 + $0x40] sm:$0xff] %v571
        %604 = vst [vmem:[%s264 + $0x48] sm:$0xff] %v572
        %605 = vst [vmem:[%s264 + $0x50] sm:$0xff] %v573
        %606 = vst [vmem:[%s264 + $0x58] sm:$0xff] %v574
        %607 = vst [vmem:[%s264 + $0x60] sm:$0xff] %v575
        %608 = vst [vmem:[%s264 + $0x68] sm:$0xff] %v576
        %609 = vst [vmem:[%s264 + $0x70] sm:$0xff] %v577
        %610 = vst [vmem:[%s264 + $0x78] sm:$0xff] %v578
        %s611 = sand.u32 %s126, 1
        %s612 = scalar_lea.sflag [#allocation4], %s611
        %s613 = sand.u32 %s126, 1
        %s614 = smul.addr %s613, 128
        %s615 = scalar_lea.vmem [#allocation9], %s614
        %s616 = sand.u32 %s156, 1
        %s617 = scalar_lea.sflag [#allocation11], %s616
        %s618 = sand.u32 %s156, 1
        %s619 = smul.addr %s618, 128
        %s620 = scalar_lea.vmem [#allocation10], %s619
        // Predicated region
        $region45: #{tpu_custom_call.1} parent=31 // pred_check
          %p621 = pneg %p136
        $region46: #{tpu_custom_call.1} parent=31 // pred_check_branch
          %623 = sbr.rel (%p621) target = $region48
        $region47: #{tpu_custom_call.1} parent=31 // pred_region
          %s624 = smul.u32 16, %s30
          %s626 = ssub.s32 2048, 2048
          %627 = vsyncadd %s612, %s626
          %s628 = sadd.s32 %s31, %s624
          %s629 = smul.addr %s32, 16
          %s630 = sadd.s32 %s628, %s629
          %s631 = smul.addr %s630, 128
          %s632 = scalar_lea.hbm %s3, %s631
          %s633 = sshll.u32 %s615, 4
          %s634 = int_to_ptr.vmem [resolvable:$true] %s633
          %639 = dma.vmem_to_hbm [thread:$0]  %s634, 2048, %s632, %s612, 128, 128, 8
        $region48: #{tpu_custom_call.1} parent=31 // pred_fallthru
          _
        // Predicated region
        $region49: #{tpu_custom_call.1} parent=31 // pred_check
          %p640 = pneg %p166
        $region50: #{tpu_custom_call.1} parent=31 // pred_check_branch
          %642 = sbr.rel (%p640) target = $region52
        $region51: #{tpu_custom_call.1} parent=31 // pred_region
          %s643 = smul.u32 16, %s30
          %s645 = ssub.s32 2048, 2048
          %646 = vsyncadd %s617, %s645
          %s647 = sadd.s32 %s31, %s643
          %s648 = smul.addr %s32, 16
          %s649 = sadd.s32 %s647, %s648
          %s650 = smul.addr %s649, 128
          %s651 = scalar_lea.hbm %s4, %s650
          %s652 = sshll.u32 %s620, 4
          %s653 = int_to_ptr.vmem [resolvable:$true] %s652
          %658 = dma.vmem_to_hbm [thread:$0]  %s653, 2048, %s651, %s617, 128, 128, 8
        $region52: #{tpu_custom_call.1} parent=31 // pred_fallthru
          _
      $region32: #{tpu_custom_call.1} parent=5 // pred_fallthru
        _
      %p659 = scmp.le.s32.totalorder 2, %s20
      // Predicated region
      $region53: #{tpu_custom_call.1} parent=5 // pred_check
        %p660 = pneg %p659
      $region54: #{tpu_custom_call.1} parent=5 // pred_check_branch
        %662 = sbr.rel (%p660) target = $region56
      $region55: #{tpu_custom_call.1} parent=5 // pred_region
        %s663 = ssub.s32 %s20, 2
        // Predicated region
        $region57: #{tpu_custom_call.1} parent=55 // pred_check
          %p664 = pneg %p142
        $region58: #{tpu_custom_call.1} parent=55 // pred_check_branch
          %666 = sbr.rel (%p664) target = $region60
        $region59: #{tpu_custom_call.1} parent=55 // pred_region
          %s667 = sand.u32 %s127, 1
          %s668 = scalar_lea.sflag [#allocation4], %s667
          %s669 = sand.u32 %s127, 1
          %s670 = smul.addr %s669, 128
          %s671 = scalar_lea.vmem [#allocation9], %s670
          %672 = dma.done %s668, 2048
        $region60: #{tpu_custom_call.1} parent=55 // pred_fallthru
          _
        // Predicated region
        $region61: #{tpu_custom_call.1} parent=55 // pred_check
          %p673 = pneg %p172
        $region62: #{tpu_custom_call.1} parent=55 // pred_check_branch
          %675 = sbr.rel (%p673) target = $region64
        $region63: #{tpu_custom_call.1} parent=55 // pred_region
          %s676 = sand.u32 %s157, 1
          %s677 = scalar_lea.sflag [#allocation11], %s676
          %s678 = sand.u32 %s157, 1
          %s679 = smul.addr %s678, 128
          %s680 = scalar_lea.vmem [#allocation10], %s679
          %681 = dma.done %s677, 2048
        $region64: #{tpu_custom_call.1} parent=55 // pred_fallthru
          _
      $region56: #{tpu_custom_call.1} parent=5 // pred_fallthru
        _
    $region6: #{tpu_custom_call.1} parent=1 // loop_footer
      %s24 = sadd.s32 1, %s20
    $region7: #{tpu_custom_call.1} parent=1 // loop_footer_branch
      %19 = sbr.rel target = $region3
    $region8: #{tpu_custom_call.1} parent=1 // loop_exit
      _
    %682 = vsyncpa [#allocation3], 1
    %s683 = scalar_lea.sflag [#allocation3], 1
    %684 = vsyncpa %s683, 1
    %685 = vsyncpa [#allocation4], 1
    %s686 = scalar_lea.sflag [#allocation4], 1
    %687 = vsyncpa %s686, 1
    %688 = vsyncpa [#allocation11], 1
    %s689 = scalar_lea.sflag [#allocation11], 1
    %690 = vsyncpa %s689, 1
    %691 = vsyncpa [#allocation5], 1
    %s692 = scalar_lea.sflag [#allocation5], 1
    %693 = vsyncpa %s692, 1
    %694 = vsyncpa [#allocation6], 1
    %s695 = scalar_lea.sflag [#allocation6], 1
    %696 = vsyncpa %s695, 1

</llo_original>
